<compile_context>
chip_gen: v7x
topology: tpu7x:2x2x1
jax: 0.10.0
libtpu: 0.0.40
codegen_flags: <defaults>
</compile_context>

<pallas_src>
import functools
from dataclasses import dataclass

import jax
import jax.numpy as jnp
from jax.experimental import pallas as pl
from jax.experimental.pallas import tpu as pltpu


def _round_up(x, m):
    return ((x + m - 1) // m) * m


# ---------------------------------------------------------------------------
# Chip introspection (best effort, safe fallbacks).
# ---------------------------------------------------------------------------
@dataclass(frozen=True)
class _ChipInfo:
    vmem_budget: int   # VMEM bytes we allow the kernel to use (with headroom)
    mxu_256: bool      # 2x256^2 MXU (v6e/v7x) vs 4x128^2 (v5e)
    multi_core: bool   # >1 TensorCore per chip (v7x)


@functools.lru_cache(maxsize=1)
def _chip_info() -> _ChipInfo:
    vmem_phys = None
    try:
        info = pltpu.get_tpu_info()
        vmem_phys = getattr(info, "vmem_capacity_bytes", None)
    except Exception:
        vmem_phys = None
    kind = ""
    try:
        kind = jax.devices()[0].device_kind.lower()
    except Exception:
        pass
    if not vmem_phys:
        vmem_phys = 64 * 1024 * 1024  # conservative: v7x per-TC VMEM
    mxu_256 = "v5" not in kind        # v6e/v7x: 2x256^2 MXU; v5e: 4x128^2
    multi_core = "v7" in kind         # v7x: 2 TensorCores per chip
    # ~25% headroom for compiler scratch / semaphores / internal buffering:
    #   v7x (64 MiB physical) -> ~48 MiB cap; v5e/v6e (128 MiB) -> ~96 MiB cap.
    return _ChipInfo(int(vmem_phys) * 3 // 4, mxu_256, multi_core)


# ---------------------------------------------------------------------------
# Kernels.
# ---------------------------------------------------------------------------
def _linear_kernel_single_k(x_ref, w_ref, b_ref, o_ref):
    # Whole K fits in one tile: no scratch, no accumulator round-trip.
    o_ref[...] = (
        jnp.dot(x_ref[...], w_ref[...], preferred_element_type=jnp.float32)
        + b_ref[...]
    ).astype(o_ref.dtype)


def _linear_kernel_multi_k(x_ref, w_ref, b_ref, o_ref, acc_ref):
    k = pl.program_id(2)
    nk = pl.num_programs(2)

    @pl.when(k == 0)
    def _():
        acc_ref[...] = jnp.zeros_like(acc_ref)

    @pl.when(k != nk - 1)
    def _():
        acc_ref[...] += jnp.dot(
            x_ref[...], w_ref[...], preferred_element_type=jnp.float32
        )

    @pl.when(k == nk - 1)
    def _():
        # Fold the final partial product and the bias into the finalize store
        # (saves one full accumulator read-modify-write on the last K step).
        o_ref[...] = (
            acc_ref[...]
            + jnp.dot(x_ref[...], w_ref[...], preferred_element_type=jnp.float32)
            + b_ref[...]
        ).astype(o_ref.dtype)


# ---------------------------------------------------------------------------
# Module wrapper with cached (pre-transposed / padded / cast) parameters.
# ---------------------------------------------------------------------------
class PallasLinearSVM:
    """Pallas TPU forward of _LinearSVM (nn.Linear): y = x @ W^T + b.

    The weight is transposed / padded / cast exactly once at construction.
    Pass compute_dtype=jnp.bfloat16 on v6e/v7x for ~2x MXU throughput and half
    the DMA bytes (f32 accumulation is kept; results deviate from an f32
    reference beyond ~1e-2 relative, so only use it when that is acceptable).
    """

    def __init__(self, weight, bias, compute_dtype=None):
        weight = jnp.asarray(weight)
        bias = jnp.asarray(bias)
        self.D_out, self.D_in = weight.shape
        self.compute_dtype = jnp.dtype(compute_dtype) if compute_dtype else weight.dtype
        self.info = _chip_info()
        in_isz = jnp.dtype(self.compute_dtype).itemsize

        # --- N tile: lane-dense; single block for SVM-head sized D_out. -----
        lane = 256 if (self.info.mxu_256 and self.D_out > 128) else 128
        np_min = _round_up(self.D_out, lane)
        self.tn = np_min if np_min <= 512 else 512
        self.Np = _round_up(self.D_out, self.tn)

        # --- K tile: as deep as reasonable to amortize per-step overhead. ---
        tk_cap = 2048 if in_isz <= 2 else 1024
        self.tk = min(_round_up(self.D_in, 128), tk_cap)
        self.Kp = _round_up(self.D_in, self.tk)

        # --- Weight: (D_out, D_in) -> (D_in, D_out), pad, cast.  ONCE. ------
        w_t = weight.T
        if w_t.shape != (self.Kp, self.Np):
            w_t = jnp.pad(
                w_t, ((0, self.Kp - self.D_in), (0, self.Np - self.D_out))
            )
        if w_t.dtype != self.compute_dtype:
            w_t = w_t.astype(self.compute_dtype)
        self.w_p = w_t

        b = bias.reshape(1, self.D_out).astype(jnp.float32)
        if self.Np != self.D_out:
            b = jnp.pad(b, ((0, 0), (0, self.Np - self.D_out)))
        self.b_p = b

    # ------------------------------------------------------------------
    def __call__(self, x):
        B, D_in = x.shape
        assert D_in == self.D_in, "input feature dim mismatch"
        out_dtype = x.dtype
        out_isz = jnp.dtype(out_dtype).itemsize
        in_isz = jnp.dtype(self.compute_dtype).itemsize
        tn, tk, Np, Kp = self.tn, self.tk, self.Np, self.Kp
        budget = self.info.vmem_budget

        # --- M tile: spend the remaining VMEM budget on batch rows. --------
        fixed = 2 * tk * tn * in_isz + 2 * tn * 4            # W tiles + bias tiles
        per_row = 2 * tk * in_isz + 2 * tn * out_isz + tn * 4  # x + out tiles + acc
        tm_fit = max(8, (budget - fixed) // per_row)
        tm = int(min(2048, tm_fit, _round_up(B, 8)))
        tm = max(8, (tm // 8) * 8)
        Bp = _round_up(B, tm)

        # v7x: make sure both TensorCores get at least one parallel block.
        if self.info.multi_core and (Bp // tm) * (Np // tn) < 2:
            half = _round_up((B + 1) // 2, 8)
            if 8 <= half < tm:
                tm = half
                Bp = _round_up(B, tm)

        m_blocks, n_blocks, k_blocks = Bp // tm, Np // tn, Kp // tk

        # --- x pad / cast only when actually needed. ------------------------
        x_p = x
        if (Bp != B) or (Kp != D_in):
            x_p = jnp.pad(x_p, ((0, Bp - B), (0, Kp - D_in)))
        if x_p.dtype != self.compute_dtype:
            x_p = x_p.astype(self.compute_dtype)

        if k_blocks == 1:
            grid = (m_blocks, n_blocks)
            kernel = _linear_kernel_single_k
            in_specs = [
                pl.BlockSpec((tm, tk), lambda i, j: (i, 0)),   # x tile
                pl.BlockSpec((tk, tn), lambda i, j: (0, j)),   # W^T tile
                pl.BlockSpec((1, tn), lambda i, j: (0, j)),    # bias tile
            ]
            out_specs = pl.BlockSpec((tm, tn), lambda i, j: (i, j))
            scratch_shapes = []
            semantics = ("parallel", "parallel")
        else:
            grid = (m_blocks, n_blocks, k_blocks)
            kernel = _linear_kernel_multi_k
            in_specs = [
                pl.BlockSpec((tm, tk), lambda i, j, k: (i, k)),
                pl.BlockSpec((tk, tn), lambda i, j, k: (k, j)),
                pl.BlockSpec((1, tn), lambda i, j, k: (0, j)),
            ]
            out_specs = pl.BlockSpec((tm, tn), lambda i, j, k: (i, j))
            scratch_shapes = [pltpu.VMEM((tm, tn), jnp.float32)]
            semantics = ("parallel", "parallel", "arbitrary")

        cost = pl.CostEstimate(
            flops=int(2 * B * self.D_in * self.D_out),
            transcendentals=0,
            bytes_accessed=int(
                Bp * Kp * in_isz * n_blocks        # x streamed once per N block
                + Kp * Np * in_isz * m_blocks      # W re-streamed once per M block
                + Np * 4 * m_blocks                # bias
                + Bp * Np * out_isz                # output
            ),
        )

        out_padded = pl.pallas_call(
            kernel,
            out_shape=jax.ShapeDtypeStruct((Bp, Np), out_dtype),
            grid_spec=pltpu.PrefetchScalarGridSpec(
                num_scalar_prefetch=0,
                grid=grid,
                in_specs=in_specs,
                out_specs=out_specs,
                scratch_shapes=scratch_shapes,
            ),
            compiler_params=pltpu.CompilerParams(
                dimension_semantics=semantics,
                vmem_limit_bytes=int(budget),
            ),
            cost_estimate=cost,
        )(x_p, self.w_p, self.b_p)

        if Bp == B and Np == self.D_out:
            return out_padded                      # no post-kernel copy
        return out_padded[:B, : self.D_out]


def linear_svm_forward(x, weight, bias, compute_dtype=None):
    """One-shot convenience wrapper. For repeated calls, build PallasLinearSVM
    once (caches the transposed/padded/cast weight) and call it directly."""
    return PallasLinearSVM(weight, bias, compute_dtype=compute_dtype)(x)


if __name__ == "__main__":
    # Small shapes consistent with the module's forward (flat features -> classes).
    batch, input_dim, output_dim = 8, 32, 16

    key = jax.random.PRNGKey(0)
    kx, kw, kb = jax.random.split(key, 3)

    x = jax.random.normal(kx, (batch, input_dim), dtype=jnp.float32)
    # Deterministic parameter init mimicking nn.Linear's uniform(-1/sqrt(in), 1/sqrt(in)).
    bound = 1.0 / (input_dim ** 0.5)
    weight = jax.random.uniform(
        kw, (output_dim, input_dim), minval=-bound, maxval=bound, dtype=jnp.float32
    )
    bias = jax.random.uniform(
        kb, (output_dim,), minval=-bound, maxval=bound, dtype=jnp.float32
    )

    svm = PallasLinearSVM(weight, bias)   # weight prepared once here
    out = svm(x)
    out = jax.block_until_ready(out)

    # Reference check against plain JAX (same math as nn.Linear).
    ref = x @ weight.T + bias
    assert out.shape == (batch, output_dim)
    assert jnp.allclose(out, ref, atol=1e-5, rtol=1e-5)

    print("KERNEL_OK")
</pallas_src>

<mosaic_0001>
module attributes {stable_mosaic.version = 11 : i64} {
  func.func @_linear_kernel_single_k(%arg0: i32, %arg1: i32, %arg2: memref<8x128xf32, #tpu.memory_space<vmem>>, %arg3: memref<128x128xf32, #tpu.memory_space<vmem>>, %arg4: memref<1x128xf32, #tpu.memory_space<vmem>>, %arg5: memref<8x128xf32, #tpu.memory_space<vmem>>) attributes {dimension_semantics = [#tpu.dimension_semantics<parallel>, #tpu.dimension_semantics<parallel>], iteration_bounds = array<i64: 1, 1>, scalar_prefetch = 0 : i64, scratch_operands = 0 : i64, tpu.core_type = #tpu.core_type<tc>, window_params = [{transform_indices = @transform_0, window_bounds = array<i64: 8, 128>}, {transform_indices = @transform_1, window_bounds = array<i64: 128, 128>}, {transform_indices = @transform_2, window_bounds = array<i64: 1, 128>}, {transform_indices = @transform_3, window_bounds = array<i64: 8, 128>}]} {
    %c0 = arith.constant 0 : index
    %c0_0 = arith.constant 0 : index
    %0 = vector.load %arg2[%c0, %c0_0] : memref<8x128xf32, #tpu.memory_space<vmem>>, vector<8x128xf32>
    %c0_1 = arith.constant 0 : index
    %c0_2 = arith.constant 0 : index
    %1 = vector.load %arg3[%c0_1, %c0_2] : memref<128x128xf32, #tpu.memory_space<vmem>>, vector<128x128xf32>
    %cst = arith.constant dense<0.000000e+00> : vector<8x128xf32>
    %2 = tpu.matmul %0, %1, %cst {dimension_numbers = #tpu.dot_dimension_numbers<[1], [0], [0], [1], [0, 0, 1, 1], [], []>} : vector<8x128xf32>, vector<128x128xf32>, vector<8x128xf32> -> vector<8x128xf32>
    %c0_3 = arith.constant 0 : index
    %c0_4 = arith.constant 0 : index
    %3 = vector.load %arg4[%c0_3, %c0_4] : memref<1x128xf32, #tpu.memory_space<vmem>>, vector<1x128xf32>
    %4 = vector.broadcast %3 : vector<1x128xf32> to vector<8x128xf32>
    %5 = arith.addf %2, %4 : vector<8x128xf32>
    %c0_5 = arith.constant 0 : index
    %c0_6 = arith.constant 0 : index
    %6 = vector.load %arg5[%c0_5, %c0_6] : memref<8x128xf32, #tpu.memory_space<vmem>>, vector<8x128xf32>
    tpu.vector_store %arg5[%c0_5, %c0_6], %5 {strides = array<i32>} : memref<8x128xf32, #tpu.memory_space<vmem>>, vector<8x128xf32>,
    return
  }
  func.func @transform_0(%arg0: i32, %arg1: i32) -> (i32, i32) {
    %c0_i32 = arith.constant 0 : i32
    %c0_i32_0 = arith.constant 0 : i32
    return %arg0, %c0_i32 : i32, i32
  }
  func.func @transform_1(%arg0: i32, %arg1: i32) -> (i32, i32) {
    %c0_i32 = arith.constant 0 : i32
    %c0_i32_0 = arith.constant 0 : i32
    return %c0_i32, %arg1 : i32, i32
  }
  func.func @transform_2(%arg0: i32, %arg1: i32) -> (i32, i32) {
    %c0_i32 = arith.constant 0 : i32
    %c0_i32_0 = arith.constant 0 : i32
    return %c0_i32, %arg1 : i32, i32
  }
  func.func @transform_3(%arg0: i32, %arg1: i32) -> (i32, i32) {
    %c0_i32 = arith.constant 0 : i32
    return %arg0, %arg1 : i32, i32
  }
}

</mosaic_0001>

<llo_original>
// kernel: tpu_custom_call.1
$region0: #{tpu_custom_call.1}
  #allocation0 [shape = 'u32[]', space=smem, size = 0x4, offset = 0x4, fixed_abs, tag = 'smem constant byte address 0x4 - core index']
  #allocation1 [shape = 'u32[144,128]{1,0:T(1,128)}', space=vmem, size = 0x12000, scoped, tag = 'internal scratch']
  %s0 = inlined_call_operand.hbm [shape: f32[8,128], index: 0, kind: input, shape index: {}]
  %s1 = inlined_call_operand.hbm [shape: f32[128,128], index: 1, kind: input, shape index: {}]
  %s2 = inlined_call_operand.vmem [shape: f32[1,128], index: 2, kind: input, shape index: {}]
  %s3 = inlined_call_operand.hbm [shape: f32[8,128], index: 3, kind: output, shape index: {}]
  %s4 = sld [smem:[#allocation0]]
  $region30: #{tpu_custom_call.1} parent=0
    _
  %s6 = ssub.s32 1, %s4
  %s7 = scalar_select 0, %s6, %s4
  $region1: #{tpu_custom_call.1} parent=0
    #allocation2 [shape = 'u8[4096]{0}', space=vmem, size = 0x1000, scoped, tag = 'input window, operand 0, single buffered']
    #allocation3 [shape = 's32[1]{0}', space=sflag, size = 0x4, scoped, tag = 'scoped memory for tpu_custom_call.1']
    #allocation4 [shape = 's32[1]{0}', space=sflag, size = 0x4, scoped, tag = 'scoped memory for tpu_custom_call.1']
    #allocation5 [shape = 'u8[65536]{0}', space=vmem, size = 0x10000, scoped, tag = 'input window, operand 1, single buffered']
    #allocation6 [shape = 's32[1]{0}', space=sflag, size = 0x4, scoped, tag = 'scoped memory for tpu_custom_call.1']
    #allocation7 [shape = 'u8[4096]{0}', space=vmem, size = 0x1000, scoped, tag = 'output window, operand 0, single buffered']
    %8 = vsyncpa [#allocation3], 0
    %9 = vsyncpa [#allocation6], 0
    %10 = vsyncpa [#allocation4], 0
    // Predicated region
    $region2: #{tpu_custom_call.1} parent=1 // pred_check
      _
    $region3: #{tpu_custom_call.1} parent=1 // pred_check_branch
      %12 = sbr.rel (0) target = $region5
    $region4: #{tpu_custom_call.1} parent=1 // pred_region
      %s14 = ssub.s32 128, 128
      %15 = vsyncadd [#allocation3], %s14
      %s17 = sshll.u32 [#allocation2], 4
      %s18 = int_to_ptr.vmem [resolvable:$true] %s17
      %20 = dma.hbm_to_vmem [thread:$0]  %s0, 128, %s18, [#allocation3]
    $region5: #{tpu_custom_call.1} parent=1 // pred_fallthru
      _
    // Predicated region
    $region6: #{tpu_custom_call.1} parent=1 // pred_check
      _
    $region7: #{tpu_custom_call.1} parent=1 // pred_check_branch
      %22 = sbr.rel (0) target = $region9
    $region8: #{tpu_custom_call.1} parent=1 // pred_region
      %s24 = ssub.s32 2048, 2048
      %25 = vsyncadd [#allocation6], %s24
      %s26 = sshll.u32 [#allocation5], 4
      %s27 = int_to_ptr.vmem [resolvable:$true] %s26
      %32 = dma.hbm_to_vmem [thread:$0]  %s1, 2048, %s27, [#allocation6], 128, 128, 8
    $region9: #{tpu_custom_call.1} parent=1 // pred_fallthru
      _
    // Predicated region
    $region10: #{tpu_custom_call.1} parent=1 // pred_check
      _
    $region11: #{tpu_custom_call.1} parent=1 // pred_check_branch
      %34 = sbr.rel (0) target = $region13
    $region12: #{tpu_custom_call.1} parent=1 // pred_region
      _
    $region13: #{tpu_custom_call.1} parent=1 // pred_fallthru
      _
    // Predicated region
    $region14: #{tpu_custom_call.1} parent=1 // pred_check
      _
    $region15: #{tpu_custom_call.1} parent=1 // pred_check_branch
      %36 = sbr.rel (0) target = $region17
    $region16: #{tpu_custom_call.1} parent=1 // pred_region
      %37 = dma.done [#allocation3], 128
    $region17: #{tpu_custom_call.1} parent=1 // pred_fallthru
      _
    // Predicated region
    $region18: #{tpu_custom_call.1} parent=1 // pred_check
      _
    $region19: #{tpu_custom_call.1} parent=1 // pred_check_branch
      %39 = sbr.rel (0) target = $region21
    $region20: #{tpu_custom_call.1} parent=1 // pred_region
      %40 = dma.done [#allocation6], 2048
    $region21: #{tpu_custom_call.1} parent=1 // pred_fallthru
      _
    %v41 = vld [vmem:[#allocation2] sm:$0xff]
    %v42 = vld [vmem:[#allocation5] sm:$0xff]
    %v43 = vld [vmem:[#allocation5 + $0x8] sm:$0xff]
    %v44 = vld [vmem:[#allocation5 + $0x10] sm:$0xff]
    %v45 = vld [vmem:[#allocation5 + $0x18] sm:$0xff]
    %v46 = vld [vmem:[#allocation5 + $0x20] sm:$0xff]
    %v47 = vld [vmem:[#allocation5 + $0x28] sm:$0xff]
    %v48 = vld [vmem:[#allocation5 + $0x30] sm:$0xff]
    %v49 = vld [vmem:[#allocation5 + $0x38] sm:$0xff]
    %v50 = vld [vmem:[#allocation5 + $0x40] sm:$0xff]
    %v51 = vld [vmem:[#allocation5 + $0x48] sm:$0xff]
    %v52 = vld [vmem:[#allocation5 + $0x50] sm:$0xff]
    %v53 = vld [vmem:[#allocation5 + $0x58] sm:$0xff]
    %v54 = vld [vmem:[#allocation5 + $0x60] sm:$0xff]
    %v55 = vld [vmem:[#allocation5 + $0x68] sm:$0xff]
    %v56 = vld [vmem:[#allocation5 + $0x70] sm:$0xff]
    %v57 = vld [vmem:[#allocation5 + $0x78] sm:$0xff]
    %v58 = vld [vmem:[%s2] sm:$0x1]
    %v60 = vlaneseq
    %v61 = vshrl.u32 %v60, 7
    %v62 = vsub.s32 0, %v61
    %v63 = vrot.slane %v58, %v62
    %65 = vmatprep.subr.mxu0 0.0
    %66 = vmatpush1.msra.mxu0 %v42
    %67 = vmatprep.subr.mxu0 0.0
    %68 = vmatpush1.msra.mxu0 %v43
    %69 = vmatprep.subr.mxu0 0.0
    %70 = vmatpush1.msra.mxu0 %v44
    %71 = vmatprep.subr.mxu0 0.0
    %72 = vmatpush1.msra.mxu0 %v45
    %73 = vmatprep.subr.mxu0 0.0
    %74 = vmatpush1.msra.mxu0 %v46
    %75 = vmatprep.subr.mxu0 0.0
    %76 = vmatpush1.msra.mxu0 %v47
    %77 = vmatprep.subr.mxu0 0.0
    %78 = vmatpush1.msra.mxu0 %v48
    %79 = vmatprep.subr.mxu0 0.0
    %80 = vmatpush1.msra.mxu0 %v49
    %81 = vmatprep.subr.mxu0 0.0
    %82 = vmatpush1.msra.mxu0 %v50
    %83 = vmatprep.subr.mxu0 0.0
    %84 = vmatpush1.msra.mxu0 %v51
    %85 = vmatprep.subr.mxu0 0.0
    %86 = vmatpush1.msra.mxu0 %v52
    %87 = vmatprep.subr.mxu0 0.0
    %88 = vmatpush1.msra.mxu0 %v53
    %89 = vmatprep.subr.mxu0 0.0
    %90 = vmatpush1.msra.mxu0 %v54
    %91 = vmatprep.subr.mxu0 0.0
    %92 = vmatpush1.msra.mxu0 %v55
    %93 = vmatprep.subr.mxu0 0.0
    %94 = vmatpush1.msra.mxu0 %v56
    %95 = vmatprep.subr.mxu0 0.0
    %96 = vmatpush1.msra.mxu0 %v57
    %97 = vmatprep.subr.mxu0 0.0
    %98 = vmatpush1.msra.mxu0 0.0
    %99 = vmatprep.subr.mxu0 0.0
    %100 = vmatpush1.msra.mxu0 0.0
    %101 = vmatprep.subr.mxu0 0.0
    %102 = vmatpush1.msra.mxu0 0.0
    %103 = vmatprep.subr.mxu0 0.0
    %104 = vmatpush1.msra.mxu0 0.0
    %105 = vmatprep.subr.mxu0 0.0
    %106 = vmatpush1.msra.mxu0 0.0
    %107 = vmatprep.subr.mxu0 0.0
    %108 = vmatpush1.msra.mxu0 0.0
    %109 = vmatprep.subr.mxu0 0.0
    %110 = vmatpush1.msra.mxu0 0.0
    %111 = vmatprep.subr.mxu0 0.0
    %112 = vmatpush1.msra.mxu0 0.0
    %113 = vmatprep.subr.mxu0 0.0
    %114 = vmatpush1.msra.mxu0 0.0
    %115 = vmatprep.subr.mxu0 0.0
    %116 = vmatpush1.msra.mxu0 0.0
    %117 = vmatprep.subr.mxu0 0.0
    %118 = vmatpush1.msra.mxu0 0.0
    %119 = vmatprep.subr.mxu0 0.0
    %120 = vmatpush1.msra.mxu0 0.0
    %121 = vmatprep.subr.mxu0 0.0
    %122 = vmatpush1.msra.mxu0 0.0
    %123 = vmatprep.subr.mxu0 0.0
    %124 = vmatpush1.msra.mxu0 0.0
    %125 = vmatprep.subr.mxu0 0.0
    %126 = vmatpush1.msra.mxu0 0.0
    %127 = vmatprep.subr.mxu0 0.0
    %128 = vmatpush1.msra.mxu0 0.0
    %129 = vmatprep.mubr.f32.mxu0 0.0
    %130 = vmatmul.mubr.f32.gmra.mrb[0].mxu0 %v41
    %v131 = vpop.f32.mrb[0].mxu0
    %v132 = vadd.f32 %v63, %v131
    %v133 = vpop.f32.mrb[0].mxu0
    %134 = vdwg.mxu0
    %135 = vst [vmem:[#allocation7] sm:$0xff] %v132
    // Predicated region
    $region22: #{tpu_custom_call.1} parent=1 // pred_check
      _
    $region23: #{tpu_custom_call.1} parent=1 // pred_check_branch
      %137 = sbr.rel (0) target = $region25
    $region24: #{tpu_custom_call.1} parent=1 // pred_region
      %s139 = ssub.s32 128, 128
      %140 = vsyncadd [#allocation4], %s139
      %s142 = sshll.u32 [#allocation7], 4
      %s143 = int_to_ptr.vmem [resolvable:$true] %s142
      %145 = dma.vmem_to_hbm [thread:$0]  %s143, 128, %s3, [#allocation4]
    $region25: #{tpu_custom_call.1} parent=1 // pred_fallthru
      _
    // Predicated region
    $region26: #{tpu_custom_call.1} parent=1 // pred_check
      _
    $region27: #{tpu_custom_call.1} parent=1 // pred_check_branch
      %147 = sbr.rel (0) target = $region29
    $region28: #{tpu_custom_call.1} parent=1 // pred_region
      %148 = dma.done [#allocation4], 128
    $region29: #{tpu_custom_call.1} parent=1 // pred_fallthru
      _
    %149 = vsyncpa [#allocation3], 1
    %150 = vsyncpa [#allocation6], 1
    %151 = vsyncpa [#allocation4], 1

</llo_original>
